<compile_context>
chip_gen: v7x
topology: tpu7x:2x2x1
jax: 0.10.0
libtpu: 0.0.40
codegen_flags: <defaults>
</compile_context>

<pallas_src>
import functools

import jax
import jax.numpy as jnp
from jax.experimental import pallas as pl
from jax.experimental.pallas import tpu as pltpu

_LANE = 128      # lane width (last dim)
_SUBLANE = 16    # bf16 sublane packing (second-to-last dim)


def _round_up(x, m):
    return ((x + m - 1) // m) * m


@functools.lru_cache(maxsize=1)
def _chip_generation():
    try:
        kind = jax.devices()[0].device_kind.lower()
    except Exception:
        return "default"
    if "v7" in kind:
        return "v7x"
    if "v6" in kind or "trillium" in kind:
        return "v6e"
    if "v5 lite" in kind or "v5lite" in kind or "v5e" in kind:
        return "v5e"
    return "default"


# Preferred (tm, tn, tk) per generation.
_TILE_PREFS = {
    "v7x": (1024, 1024, 512),     # ~16 MiB, fits 32 MiB scoped default
    "v6e": (1024, 2048, 512),     # ~30 MiB, needs vmem_limit_bytes raised
    "v5e": (512, 1024, 512),      # ~9 MiB, > v5e's 16 MiB default with margin
    "default": (1024, 1024, 512), # safe everywhere
}

# Ceiling we are willing to request for scoped VMEM.
_VMEM_CAP = {
    "v7x": 48 << 20,       # 64 MiB physical per TC
    "v6e": 100 << 20,      # 128 MiB physical
    "v5e": 100 << 20,      # 128 MiB physical
    "default": 48 << 20,
}


def _pick_tile(dim, pref, align, max_waste=0.12):
    """Largest tile <= pref (multiple of `align`) with bounded pad-to-tile waste."""
    hi = min(pref, _round_up(dim, align))
    hi = max(align, (hi // align) * align)
    t = hi
    while t >= align:
        waste = (_round_up(dim, t) - dim) / dim
        if waste <= max_waste:
            return t
        t -= align
    return align


def _snake_alt_kernel(x_ref, w_ref, b_ref, o_ref, acc_ref):
    """One (tm, tn) output tile; grid axis 2 is the K reduction."""
    k = pl.program_id(2)

    @pl.when(k == 0)
    def _():
        acc_ref[...] = jnp.zeros_like(acc_ref)

    # bf16 x bf16 -> f32 accumulation on the MXU.
    acc_ref[...] += jnp.dot(
        x_ref[...], w_ref[...], preferred_element_type=jnp.float32
    )

    @pl.when(k == pl.num_programs(2) - 1)
    def _():
        y = acc_ref[...] + b_ref[...]
        o_ref[...] = (0.5 * y + jnp.sin(y) ** 2).astype(o_ref.dtype)


def prepare_weights(w_t, b):
    """Pad + bf16-cast the static weights ONCE, outside the per-call hot path.

    w_t: [K, N] (transpose of PyTorch's [out_features, in_features] weight).
    b:   [N] or [1, N] bias.
    Returns an opaque params tuple for snake_alt_layer.
    """
    w_t = jnp.asarray(w_t)
    K, N = w_t.shape
    _, tn_pref, tk_pref = _TILE_PREFS[_chip_generation()]
    tn = _pick_tile(N, tn_pref, _LANE)
    tk = _pick_tile(K, tk_pref, _LANE)
    Kp, Np = _round_up(K, tk), _round_up(N, tn)

    w_bf = w_t.astype(jnp.bfloat16)
    if (Kp, Np) != (K, N):
        w_bf = jnp.pad(w_bf, ((0, Kp - K), (0, Np - N)))

    b_f32 = jnp.asarray(b).reshape(1, N).astype(jnp.float32)
    if Np != N:
        b_f32 = jnp.pad(b_f32, ((0, 0), (0, Np - N)))

    return (w_bf, b_f32, N, K, tn, tk)


@functools.partial(
    jax.jit,
    static_argnames=("n", "tm", "tn", "tk", "out_dtype", "vmem_limit"),
)
def _snake_alt_call(x, w_bf, b_f32, *, n, tm, tn, tk, out_dtype, vmem_limit):
    M, K = x.shape
    Kp, Np = w_bf.shape
    Mp = _round_up(M, tm)

    # Per-call: only x gets cast/padded (no-op when already bf16 and aligned).
    x_bf = x.astype(jnp.bfloat16)
    if (Mp, Kp) != (M, K):
        x_bf = jnp.pad(x_bf, ((0, Mp - M), (0, Kp - K)))

    grid = (Mp // tm, Np // tn, Kp // tk)

    out = pl.pallas_call(
        _snake_alt_kernel,
        out_shape=jax.ShapeDtypeStruct((Mp, Np), out_dtype),
        grid_spec=pltpu.PrefetchScalarGridSpec(
            num_scalar_prefetch=0,
            grid=grid,
            in_specs=[
                pl.BlockSpec((tm, tk), lambda i, j, k: (i, k)),  # x tile
                pl.BlockSpec((tk, tn), lambda i, j, k: (k, j)),  # w tile
                pl.BlockSpec((1, tn), lambda i, j, k: (0, j)),   # bias tile
            ],
            out_specs=pl.BlockSpec((tm, tn), lambda i, j, k: (i, j)),
            scratch_shapes=[pltpu.VMEM((tm, tn), jnp.float32)],
        ),
        compiler_params=pltpu.CompilerParams(
            dimension_semantics=("parallel", "parallel", "arbitrary"),
            vmem_limit_bytes=vmem_limit,
        ),
    )(x_bf, w_bf, b_f32)

    if (Mp, Np) != (M, n):
        out = out[:M, :n]
    return out


def snake_alt_layer(x, params, *, out_dtype=None):
    """SnakeAltLayer forward: 0.5*(x@W^T+b) + sin(x@W^T+b)**2.

    x:      [..., K] input.
    params: output of prepare_weights(w_t, b).
    """
    w_bf, b_f32, n, k, tn, tk = params
    assert x.shape[-1] == k, f"expected last dim {k}, got {x.shape[-1]}"
    out_dtype = jnp.dtype(x.dtype if out_dtype is None else out_dtype)

    lead = x.shape[:-1]
    x2 = x.reshape(-1, k)
    M = x2.shape[0]

    gen = _chip_generation()
    tm_pref = _TILE_PREFS[gen][0]
    tm = _pick_tile(M, tm_pref, _SUBLANE)

    # Megacore guard (v7x has 2 TCs): make sure the parallel axes have >= 2 blocks.
    if gen == "v7x":
        gn = w_bf.shape[1] // tn
        gm = pl.cdiv(M, tm)
        if gm * gn == 1:
            if M >= 256:
                tm = _round_up(pl.cdiv(M, 2), _SUBLANE)
            elif tn >= 256 and tn % 256 == 0:
                tn = tn // 2

    # VMEM footprint (double-buffered ins/outs + f32 accumulator) -> scoped limit.
    out_bytes = out_dtype.itemsize
    footprint = (
        2 * tm * tk * 2            # x tile, bf16
        + 2 * tk * tn * 2          # w tile, bf16
        + 2 * 1 * tn * 4           # bias tile, f32
        + 2 * tm * tn * out_bytes  # out tile
        + tm * tn * 4              # accumulator scratch
    )
    vmem_limit = int(min(_VMEM_CAP[gen], max(32 << 20, footprint + (16 << 20))))

    out2 = _snake_alt_call(
        x2, w_bf, b_f32,
        n=n, tm=tm, tn=tn, tk=tk, out_dtype=out_dtype, vmem_limit=vmem_limit,
    )
    return out2.reshape(*lead, n)


def init_params(key, in_features, out_features, dtype=jnp.float32):
    """Deterministic init mirroring the PyTorch module's __init__.

    weight: xavier_normal_ -> N(0, sqrt(2 / (fan_in + fan_out)))
    bias:   PyTorch Linear default -> U(-1/sqrt(fan_in), 1/sqrt(fan_in))
    """
    kw, kb = jax.random.split(key)
    std = (2.0 / (in_features + out_features)) ** 0.5
    # PyTorch weight shape is [out, in]; we store the transpose [in, out].
    w_t = (std * jax.random.normal(kw, (in_features, out_features))).astype(dtype)
    bound = 1.0 / (in_features ** 0.5)
    b = jax.random.uniform(
        kb, (1, out_features), minval=-bound, maxval=bound
    ).astype(dtype)
    return w_t, b


if __name__ == "__main__":
    key = jax.random.PRNGKey(0)
    k_x, k_p = jax.random.split(key)

    batch = 16
    in_features = 32
    out_features = 32

    x = jax.random.normal(k_x, (batch, in_features), dtype=jnp.float32)
    w_t, b = init_params(k_p, in_features, out_features)

    params = prepare_weights(w_t, b)      # one-time pad + bf16 cast of weights
    out = snake_alt_layer(x, params)
    out = jax.block_until_ready(out)

    # Pure-JAX reference (matching the kernel's bf16 matmul operands, f32 epilogue).
    y_ref = (
        x.astype(jnp.bfloat16).astype(jnp.float32)
        @ w_t.astype(jnp.bfloat16).astype(jnp.float32)
    ) + b
    ref = 0.5 * y_ref + jnp.sin(y_ref) ** 2

    assert out.shape == (batch, out_features)
    max_err = float(jnp.max(jnp.abs(out - ref)))
    assert jnp.allclose(out, ref, atol=2e-3, rtol=2e-3), max_err

    print("KERNEL_OK")
</pallas_src>

<mosaic_0001>
module attributes {stable_mosaic.version = 11 : i64} {
  func.func @_snake_alt_kernel(%arg0: i32, %arg1: i32, %arg2: i32, %arg3: memref<16x128xbf16, #tpu.memory_space<vmem>>, %arg4: memref<128x128xbf16, #tpu.memory_space<vmem>>, %arg5: memref<1x128xf32, #tpu.memory_space<vmem>>, %arg6: memref<16x128xf32, #tpu.memory_space<vmem>>, %arg7: memref<16x128xf32, #tpu.memory_space<vmem>>) attributes {dimension_semantics = [#tpu.dimension_semantics<parallel>, #tpu.dimension_semantics<parallel>, #tpu.dimension_semantics<arbitrary>], iteration_bounds = array<i64: 1, 1, 1>, scalar_prefetch = 0 : i64, scratch_operands = 1 : i64, tpu.core_type = #tpu.core_type<tc>, window_params = [{transform_indices = @transform_0, window_bounds = array<i64: 16, 128>}, {transform_indices = @transform_1, window_bounds = array<i64: 128, 128>}, {transform_indices = @transform_2, window_bounds = array<i64: 1, 128>}, {transform_indices = @transform_3, window_bounds = array<i64: 16, 128>}]} {
    %c0_i32 = arith.constant 0 : i32
    %0 = arith.cmpi eq, %arg2, %c0_i32 : i32
    %1 = arith.extui %0 : i1 to i32
    %c0_i32_0 = arith.constant 0 : i32
    %2 = arith.cmpi ne, %1, %c0_i32_0 : i32
    scf.if %2 {
      %cst_10 = arith.constant 0.000000e+00 : f32
      %12 = vector.broadcast %cst_10 : f32 to vector<16x128xf32>
      %c0_11 = arith.constant 0 : index
      %c0_12 = arith.constant 0 : index
      %13 = vector.load %arg7[%c0_11, %c0_12] : memref<16x128xf32, #tpu.memory_space<vmem>>, vector<16x128xf32>
      tpu.vector_store %arg7[%c0_11, %c0_12], %12 {strides = array<i32>} : memref<16x128xf32, #tpu.memory_space<vmem>>, vector<16x128xf32>,
    } else {
    }
    %c0 = arith.constant 0 : index
    %c0_1 = arith.constant 0 : index
    %3 = vector.load %arg7[%c0, %c0_1] : memref<16x128xf32, #tpu.memory_space<vmem>>, vector<16x128xf32>
    %c0_2 = arith.constant 0 : index
    %c0_3 = arith.constant 0 : index
    %4 = vector.load %arg3[%c0_2, %c0_3] : memref<16x128xbf16, #tpu.memory_space<vmem>>, vector<16x128xbf16>
    %c0_4 = arith.constant 0 : index
    %c0_5 = arith.constant 0 : index
    %5 = vector.load %arg4[%c0_4, %c0_5] : memref<128x128xbf16, #tpu.memory_space<vmem>>, vector<128x128xbf16>
    %cst = arith.constant dense<0.000000e+00> : vector<16x128xf32>
    %6 = tpu.matmul %4, %5, %cst {dimension_numbers = #tpu.dot_dimension_numbers<[1], [0], [0], [1], [0, 0, 1, 1], [], []>} : vector<16x128xbf16>, vector<128x128xbf16>, vector<16x128xf32> -> vector<16x128xf32>
    %7 = arith.addf %3, %6 : vector<16x128xf32>
    %c0_6 = arith.constant 0 : index
    %c0_7 = arith.constant 0 : index
    %8 = vector.load %arg7[%c0_6, %c0_7] : memref<16x128xf32, #tpu.memory_space<vmem>>, vector<16x128xf32>
    tpu.vector_store %arg7[%c0_6, %c0_7], %7 {strides = array<i32>} : memref<16x128xf32, #tpu.memory_space<vmem>>, vector<16x128xf32>,
    %c0_i32_8 = arith.constant 0 : i32
    %9 = arith.cmpi eq, %arg2, %c0_i32_8 : i32
    %10 = arith.extui %9 : i1 to i32
    %c0_i32_9 = arith.constant 0 : i32
    %11 = arith.cmpi ne, %10, %c0_i32_9 : i32
    scf.if %11 {
      %c0_10 = arith.constant 0 : index
      %c0_11 = arith.constant 0 : index
      %12 = vector.load %arg7[%c0_10, %c0_11] : memref<16x128xf32, #tpu.memory_space<vmem>>, vector<16x128xf32>
      %c0_12 = arith.constant 0 : index
      %c0_13 = arith.constant 0 : index
      %13 = vector.load %arg5[%c0_12, %c0_13] : memref<1x128xf32, #tpu.memory_space<vmem>>, vector<1x128xf32>
      %14 = vector.broadcast %13 : vector<1x128xf32> to vector<16x128xf32>
      %15 = arith.addf %12, %14 : vector<16x128xf32>
      %cst_14 = arith.constant 5.000000e-01 : f32
      %16 = vector.broadcast %cst_14 : f32 to vector<16x128xf32>
      %17 = arith.mulf %16, %15 : vector<16x128xf32>
      %18 = math.sin %15 : vector<16x128xf32>
      %19 = arith.mulf %18, %18 : vector<16x128xf32>
      %20 = arith.addf %17, %19 : vector<16x128xf32>
      %c0_15 = arith.constant 0 : index
      %c0_16 = arith.constant 0 : index
      %21 = vector.load %arg6[%c0_15, %c0_16] : memref<16x128xf32, #tpu.memory_space<vmem>>, vector<16x128xf32>
      tpu.vector_store %arg6[%c0_15, %c0_16], %20 {strides = array<i32>} : memref<16x128xf32, #tpu.memory_space<vmem>>, vector<16x128xf32>,
    } else {
    }
    return
  }
  func.func @transform_0(%arg0: i32, %arg1: i32, %arg2: i32) -> (i32, i32) {
    %c0_i32 = arith.constant 0 : i32
    return %arg0, %arg2 : i32, i32
  }
  func.func @transform_1(%arg0: i32, %arg1: i32, %arg2: i32) -> (i32, i32) {
    %c0_i32 = arith.constant 0 : i32
    return %arg2, %arg1 : i32, i32
  }
  func.func @transform_2(%arg0: i32, %arg1: i32, %arg2: i32) -> (i32, i32) {
    %c0_i32 = arith.constant 0 : i32
    %c0_i32_0 = arith.constant 0 : i32
    return %c0_i32, %arg1 : i32, i32
  }
  func.func @transform_3(%arg0: i32, %arg1: i32, %arg2: i32) -> (i32, i32) {
    %c0_i32 = arith.constant 0 : i32
    return %arg0, %arg1 : i32, i32
  }
}

</mosaic_0001>

<llo_original>
// kernel: _snake_alt_call.1
$region0: #{_snake_alt_call.1}
  #allocation0 [shape = 'u32[]', space=smem, size = 0x4, offset = 0x4, fixed_abs, tag = 'smem constant byte address 0x4 - core index']
  #allocation1 [shape = 'u32[144,128]{1,0:T(1,128)}', space=vmem, size = 0x12000, scoped, tag = 'internal scratch']
  #allocation2 [shape = 'f32[16,128]{1,0:T(8,128)}', space=vmem, size = 0x2000, scoped, tag = 'scratch operand']
  %s0 = inlined_call_operand.vmem [shape: bf16[16,128], index: 0, kind: input, shape index: {}]
  %s1 = inlined_call_operand.hbm [shape: bf16[128,128], index: 1, kind: input, shape index: {}]
  %s2 = inlined_call_operand.vmem [shape: f32[1,128], index: 2, kind: input, shape index: {}]
  %s3 = inlined_call_operand.hbm [shape: f32[16,128], index: 3, kind: output, shape index: {}]
  %s4 = sld [smem:[#allocation0]]
  $region34: #{_snake_alt_call.1} parent=0
    _
  %s6 = ssub.s32 1, %s4
  %s7 = scalar_select 0, %s6, %s4
  $region1: #{_snake_alt_call.1} parent=0
    #allocation3 [shape = 'u8[32768]{0}', space=vmem, size = 0x8000, scoped, tag = 'input window, operand 1, single buffered']
    #allocation4 [shape = 's32[1]{0}', space=sflag, size = 0x4, scoped, tag = 'scoped memory for _snake_alt_call.1']
    #allocation5 [shape = 's32[1]{0}', space=sflag, size = 0x4, scoped, tag = 'scoped memory for _snake_alt_call.1']
    #allocation6 [shape = 'u8[8192]{0}', space=vmem, size = 0x2000, scoped, tag = 'output window, operand 0, single buffered']
    %8 = vsyncpa [#allocation4], 0
    %9 = vsyncpa [#allocation5], 0
    // Predicated region
    $region2: #{_snake_alt_call.1} parent=1 // pred_check
      _
    $region3: #{_snake_alt_call.1} parent=1 // pred_check_branch
      %11 = sbr.rel (0) target = $region5
    $region4: #{_snake_alt_call.1} parent=1 // pred_region
      _
    $region5: #{_snake_alt_call.1} parent=1 // pred_fallthru
      _
    // Predicated region
    $region6: #{_snake_alt_call.1} parent=1 // pred_check
      _
    $region7: #{_snake_alt_call.1} parent=1 // pred_check_branch
      %13 = sbr.rel (0) target = $region9
    $region8: #{_snake_alt_call.1} parent=1 // pred_region
      %s15 = ssub.s32 1024, 1024
      %16 = vsyncadd [#allocation4], %s15
      %s17 = sshll.u32 [#allocation3], 4
      %s18 = int_to_ptr.vmem [resolvable:$true] %s17
      %23 = dma.hbm_to_vmem [thread:$0]  %s1, 1024, %s18, [#allocation4], 64, 64, 4
    $region9: #{_snake_alt_call.1} parent=1 // pred_fallthru
      _
    // Predicated region
    $region10: #{_snake_alt_call.1} parent=1 // pred_check
      _
    $region11: #{_snake_alt_call.1} parent=1 // pred_check_branch
      %25 = sbr.rel (0) target = $region13
    $region12: #{_snake_alt_call.1} parent=1 // pred_region
      _
    $region13: #{_snake_alt_call.1} parent=1 // pred_fallthru
      _
    // Predicated region
    $region14: #{_snake_alt_call.1} parent=1 // pred_check
      _
    $region15: #{_snake_alt_call.1} parent=1 // pred_check_branch
      %27 = sbr.rel (0) target = $region17
    $region16: #{_snake_alt_call.1} parent=1 // pred_region
      %28 = dma.done [#allocation4], 1024
    $region17: #{_snake_alt_call.1} parent=1 // pred_fallthru
      _
    %p30 = scmp.eq.s32.totalorder 0, 0
    // Predicated region
    $region18: #{_snake_alt_call.1} parent=1 // pred_check
      %p31 = pneg %p30
    $region19: #{_snake_alt_call.1} parent=1 // pred_check_branch
      %33 = sbr.rel (%p31) target = $region21
    $region20: #{_snake_alt_call.1} parent=1 // pred_region
      %34 = vst [vmem:[#allocation2] sm:$0xff] 0.0
      %35 = vst [vmem:[#allocation2 + $0x8] sm:$0xff] 0.0
    $region21: #{_snake_alt_call.1} parent=1 // pred_fallthru
      _
    %v36 = vld [vmem:[#allocation2] sm:$0xff]
    %v37 = vld [vmem:[#allocation2 + $0x8] sm:$0xff]
    %v38 = vld [vmem:[%s0] sm:$0xf]
    %v39 = vld [vmem:[%s0 + $0x4] sm:$0xf]
    %v40 = vld [vmem:[#allocation3] sm:$0xf]
    %v41 = vld [vmem:[#allocation3 + $0x4] sm:$0xf]
    %v42 = vld [vmem:[#allocation3 + $0x8] sm:$0xf]
    %v43 = vld [vmem:[#allocation3 + $0xc] sm:$0xf]
    %v44 = vld [vmem:[#allocation3 + $0x10] sm:$0xf]
    %v45 = vld [vmem:[#allocation3 + $0x14] sm:$0xf]
    %v46 = vld [vmem:[#allocation3 + $0x18] sm:$0xf]
    %v47 = vld [vmem:[#allocation3 + $0x1c] sm:$0xf]
    %v48 = vld [vmem:[#allocation3 + $0x20] sm:$0xf]
    %v49 = vld [vmem:[#allocation3 + $0x24] sm:$0xf]
    %v50 = vld [vmem:[#allocation3 + $0x28] sm:$0xf]
    %v51 = vld [vmem:[#allocation3 + $0x2c] sm:$0xf]
    %v52 = vld [vmem:[#allocation3 + $0x30] sm:$0xf]
    %v53 = vld [vmem:[#allocation3 + $0x34] sm:$0xf]
    %v54 = vld [vmem:[#allocation3 + $0x38] sm:$0xf]
    %v55 = vld [vmem:[#allocation3 + $0x3c] sm:$0xf]
    %v58 = vunpack.c.l.b16 %v38
    %v59 = vunpack.c.l.b16 %v39
    %v60 = vpack.c.b16 %v59, %v58
    %v78 = vunpack.c.l.b16 %v40
    %v79 = vunpack.c.l.b16 %v41
    %v80 = vunpack.c.l.b16 %v42
    %v81 = vunpack.c.l.b16 %v43
    %v82 = vunpack.c.l.b16 %v44
    %v83 = vunpack.c.l.b16 %v45
    %v84 = vunpack.c.l.b16 %v46
    %v85 = vunpack.c.l.b16 %v47
    %v86 = vunpack.c.l.b16 %v48
    %v87 = vunpack.c.l.b16 %v49
    %v88 = vunpack.c.l.b16 %v50
    %v89 = vunpack.c.l.b16 %v51
    %v90 = vunpack.c.l.b16 %v52
    %v91 = vunpack.c.l.b16 %v53
    %v92 = vunpack.c.l.b16 %v54
    %v93 = vunpack.c.l.b16 %v55
    %v94 = vpack.c.b16 %v79, %v78
    %v95 = vpack.c.b16 %v81, %v80
    %v96 = vpack.c.b16 %v83, %v82
    %v97 = vpack.c.b16 %v85, %v84
    %v98 = vpack.c.b16 %v87, %v86
    %v99 = vpack.c.b16 %v89, %v88
    %v100 = vpack.c.b16 %v91, %v90
    %v101 = vpack.c.b16 %v93, %v92
    %110 = vmatprep.subr.bf16.mxu0 0
    %111 = vmatpush1.bf16.msra.mxu0 %v94
    %112 = vmatprep.subr.bf16.mxu0 0
    %113 = vmatpush1.bf16.msra.mxu0 %v95
    %114 = vmatprep.subr.bf16.mxu0 0
    %115 = vmatpush1.bf16.msra.mxu0 %v96
    %116 = vmatprep.subr.bf16.mxu0 0
    %117 = vmatpush1.bf16.msra.mxu0 %v97
    %118 = vmatprep.subr.bf16.mxu0 0
    %119 = vmatpush1.bf16.msra.mxu0 %v98
    %120 = vmatprep.subr.bf16.mxu0 0
    %121 = vmatpush1.bf16.msra.mxu0 %v99
    %122 = vmatprep.subr.bf16.mxu0 0
    %123 = vmatpush1.bf16.msra.mxu0 %v100
    %124 = vmatprep.subr.bf16.mxu0 0
    %125 = vmatpush1.bf16.msra.mxu0 %v101
    %126 = vmatprep.subr.bf16.mxu0 0
    %127 = vmatpush1.bf16.msra.mxu0 0
    %128 = vmatprep.subr.bf16.mxu0 0
    %129 = vmatpush1.bf16.msra.mxu0 0
    %130 = vmatprep.subr.bf16.mxu0 0
    %131 = vmatpush1.bf16.msra.mxu0 0
    %132 = vmatprep.subr.bf16.mxu0 0
    %133 = vmatpush1.bf16.msra.mxu0 0
    %134 = vmatprep.subr.bf16.mxu0 0
    %135 = vmatpush1.bf16.msra.mxu0 0
    %136 = vmatprep.subr.bf16.mxu0 0
    %137 = vmatpush1.bf16.msra.mxu0 0
    %138 = vmatprep.subr.bf16.mxu0 0
    %139 = vmatpush1.bf16.msra.mxu0 0
    %140 = vmatprep.subr.bf16.mxu0 0
    %141 = vmatpush1.bf16.msra.mxu0 0
    %142 = vmatprep.mubr.bf16.mxu0 0
    %143 = vmatmul.mubr.bf16.gmra.mrb[0].mxu0 %v60
    %v144 = vpop.f32.mrb[0].mxu0
    %v145 = vadd.f32 0.0, %v144
    %v146 = vpop.f32.mrb[0].mxu0
    %v147 = vpop.f32.mrb[0].mxu0
    %v148 = vadd.f32 0.0, %v147
    %v149 = vpop.f32.mrb[0].mxu0
    %150 = vdwg.mxu0
    %v151 = vadd.f32 %v36, %v145
    %v152 = vadd.f32 %v37, %v148
    %153 = vst [vmem:[#allocation2] sm:$0xff] %v151
    %154 = vst [vmem:[#allocation2 + $0x8] sm:$0xff] %v152
    // Predicated region
    $region22: #{_snake_alt_call.1} parent=1 // pred_check
      %p155 = pneg %p30
    $region23: #{_snake_alt_call.1} parent=1 // pred_check_branch
      %157 = sbr.rel (%p155) target = $region25
    $region24: #{_snake_alt_call.1} parent=1 // pred_region
      %v158 = vld [vmem:[#allocation2] sm:$0xff]
      %v159 = vld [vmem:[#allocation2 + $0x8] sm:$0xff]
      %v160 = vld [vmem:[%s2] sm:$0x1]
      %v162 = vlaneseq
      %v163 = vshrl.u32 %v162, 7
      %v164 = vsub.s32 0, %v163
      %v165 = vrot.slane %v160, %v164
      %v167 = vadd.f32 %v158, %v165
      %v168 = vadd.f32 %v159, %v165
      %v169 = vmul.f32 %v167, 0.5
      %v170 = vmul.f32 %v168, 0.5
      %v171 = vand.u32 2147483647, %v167
      %vm172 = vcmp.le.f32.partialorder %v171, 0.7853982
      %vm173 = vcmp.lt.s32.totalorder %v167, 0
      %v174 = vand.u32 %v167, 2139095040
      %v175 = vshrl.u32 %v174, 23
      %v176 = vsub.s32 %v175, 127
      %v177 = vand.u32 2147483647, %v167
      %v178 = vand.u32 %v177, 8388607
      %v179 = vor.u32 %v178, 8388608
      %v180 = vsub.s32 0, %v179
      %v181 = vadd.s32 %v176, 1
      %vm182 = vcmp.gt.s32.totalorder %v181, 0
      %v183 = vsel %vm182, %v181, 0
      %v184 = vshrl.u32 %v183, 5
      %v185 = vand.u32 %v183, 31
      %v186 = vsub.s32 32, %v185
      %v187 = vshrl.u32 683565275, %v186
      %v188 = vshll.u32 683565275, %v185
      %v189 = vshrl.u32 2475754826, %v186
      %v190 = vor.u32 %v188, %v189
      %v191 = vshll.u32 2475754826, %v185
      %v192 = vshrl.u32 2131351028, %v186
      %v193 = vor.u32 %v191, %v192
      %v194 = vshll.u32 2131351028, %v185
      %v195 = vshrl.u32 2102212464, %v186
      %v196 = vor.u32 %v194, %v195
      %v197 = vshll.u32 2102212464, %v185
      %v198 = vshrl.u32 920167782, %v186
      %v199 = vor.u32 %v197, %v198
      %v200 = vshll.u32 920167782, %v185
      %v201 = vshrl.u32 1326507024, %v186
      %v202 = vor.u32 %v200, %v201
      %vm203 = vcmp.lt.s32.totalorder %v184, 1
      %vm204 = vcmp.lt.s32.totalorder %v184, 2
      %vm205 = vcmp.lt.s32.totalorder %v184, 3
      %vm206 = vcmp.lt.s32.totalorder %v184, 4
      %v207 = vsel %vm203, %v187, %v190
      %v208 = vsel %vm206, %v196, 2102212464
      %v209 = vsel %vm205, %v193, %v208
      %v210 = vsel %vm204, %v207, %v209
      %v211 = vsel %vm203, %v190, %v193
      %v212 = vsel %vm206, %v199, 920167782
      %v213 = vsel %vm205, %v196, %v212
      %v214 = vsel %vm204, %v211, %v213
      %v215 = vsel %vm203, %v193, %v196
      %v216 = vsel %vm206, %v202, 1326507024
      %v217 = vsel %vm205, %v199, %v216
      %v218 = vsel %vm204, %v215, %v217
      %v219 = vshll.u32 %v179, 8
      %v220 = vmul.u32.u64.compose %v219, %v218
      %v221 = vextract.low.u32 %v220
      %v222 = vextract.high.u32 %v220
      %v223 = vmul.u32.u64.compose %v219, %v214
      %v224 = vextract.low.u32 %v223
      %v225 = vextract.high.u32 %v223
      %v226 = vmul.u32 %v219, %v210
      %v227 = vadd.s32 %v222, %v224
      %vm228 = vc.u32 %v222, %v224
      %v229 = vadd.s32 %v225, 1
      %v230 = vsel %vm228, %v229, %v225
      %v231 = vadd.s32 %v226, %v230
      %v232 = vadd.s32 %v231, 536870912
      %v233 = vshrl.u32 %v232, 30
      %v234 = vshll.u32 %v233, 30
      %v235 = vsub.s32 %v231, %v234
      %vm236 = vcmp.lt.s32.totalorder %v235, 0
      %v237 = vsub.s32 0, %v235
      %v238 = vsel %vm236, %v237, %v235
      %v239 = vclz %v238
      %v240 = vsub.s32 %v239, 2
      %vm241 = vcmp.gt.s32.totalorder 0, %v240
      %v242 = vsel %vm241, 0, %v240
      %v243 = vsub.s32 32, %v242
      %v244 = vshll.u32 %v235, %v242
      %v245 = vshrl.u32 %v227, %v243
      %v246 = vor.u32 %v244, %v245
      %v247 = vsub.s32 4294967266, %v242
      %v248 = vadd.s32 %v247, 127
      %v249 = vshll.u32 %v248, 23
      %v250 = vor.u32 4788187, %v249
      %v251 = vand.u32 2147483647, %v250
      %v253 = vcvt.s32.f32 %v246
      %v254 = vmul.f32 %v253, %v251
      %v255 = vxor.u32 %v254, 2147483648
      %v256 = vsel %vm173, %v255, %v254
      %v257 = vsub.s32 4, %v233
      %v258 = vsel %vm173, %v257, %v233
      %v259 = vsel %vm172, %v167, %v256
      %v260 = vsel %vm172, 0, %v258
      %v261 = vcosq.f32.pop %v259
      %v262 = vsinq.f32.pop %v259
      %vm263 = vweird.f32 %v167
      %v264 = vadd.s32 %v260, 3
      %v265 = vand.u32 %v264, 3
      %vm266 = vcmp.lt.s32.totalorder %v265, 2
      %vm267 = vcmp.eq.s32.totalorder %v265, 0
      %v268 = vxor.u32 %v262, 2147483648
      %v269 = vsel %vm267, %v261, %v268
      %vm270 = vcmp.eq.s32.totalorder %v265, 2
      %v271 = vxor.u32 %v261, 2147483648
      %v272 = vsel %vm270, %v271, %v262
      %v273 = vsel %vm266, %v269, %v272
      %v274 = vsel %vm263, nan, %v273
      %v275 = vand.u32 2147483647, %v168
      %vm276 = vcmp.le.f32.partialorder %v275, 0.7853982
      %vm277 = vcmp.lt.s32.totalorder %v168, 0
      %v278 = vand.u32 %v168, 2139095040
      %v279 = vshrl.u32 %v278, 23
      %v280 = vsub.s32 %v279, 127
      %v281 = vand.u32 2147483647, %v168
      %v282 = vand.u32 %v281, 8388607
      %v283 = vor.u32 %v282, 8388608
      %v284 = vsub.s32 0, %v283
      %v285 = vadd.s32 %v280, 1
      %vm286 = vcmp.gt.s32.totalorder %v285, 0
      %v287 = vsel %vm286, %v285, 0
      %v288 = vshrl.u32 %v287, 5
      %v289 = vand.u32 %v287, 31
      %v290 = vsub.s32 32, %v289
      %v291 = vshrl.u32 683565275, %v290
      %v292 = vshll.u32 683565275, %v289
      %v293 = vshrl.u32 2475754826, %v290
      %v294 = vor.u32 %v292, %v293
      %v295 = vshll.u32 2475754826, %v289
      %v296 = vshrl.u32 2131351028, %v290
      %v297 = vor.u32 %v295, %v296
      %v298 = vshll.u32 2131351028, %v289
      %v299 = vshrl.u32 2102212464, %v290
      %v300 = vor.u32 %v298, %v299
      %v301 = vshll.u32 2102212464, %v289
      %v302 = vshrl.u32 920167782, %v290
      %v303 = vor.u32 %v301, %v302
      %v304 = vshll.u32 920167782, %v289
      %v305 = vshrl.u32 1326507024, %v290
      %v306 = vor.u32 %v304, %v305
      %vm307 = vcmp.lt.s32.totalorder %v288, 1
      %vm308 = vcmp.lt.s32.totalorder %v288, 2
      %vm309 = vcmp.lt.s32.totalorder %v288, 3
      %vm310 = vcmp.lt.s32.totalorder %v288, 4
      %v311 = vsel %vm307, %v291, %v294
      %v312 = vsel %vm310, %v300, 2102212464
      %v313 = vsel %vm309, %v297, %v312
      %v314 = vsel %vm308, %v311, %v313
      %v315 = vsel %vm307, %v294, %v297
      %v316 = vsel %vm310, %v303, 920167782
      %v317 = vsel %vm309, %v300, %v316
      %v318 = vsel %vm308, %v315, %v317
      %v319 = vsel %vm307, %v297, %v300
      %v320 = vsel %vm310, %v306, 1326507024
      %v321 = vsel %vm309, %v303, %v320
      %v322 = vsel %vm308, %v319, %v321
      %v323 = vshll.u32 %v283, 8
      %v324 = vmul.u32.u64.compose %v323, %v322
      %v325 = vextract.low.u32 %v324
      %v326 = vextract.high.u32 %v324
      %v327 = vmul.u32.u64.compose %v323, %v318
      %v328 = vextract.low.u32 %v327
      %v329 = vextract.high.u32 %v327
      %v330 = vmul.u32 %v323, %v314
      %v331 = vadd.s32 %v326, %v328
      %vm332 = vc.u32 %v326, %v328
      %v333 = vadd.s32 %v329, 1
      %v334 = vsel %vm332, %v333, %v329
      %v335 = vadd.s32 %v330, %v334
      %v336 = vadd.s32 %v335, 536870912
      %v337 = vshrl.u32 %v336, 30
      %v338 = vshll.u32 %v337, 30
      %v339 = vsub.s32 %v335, %v338
      %vm340 = vcmp.lt.s32.totalorder %v339, 0
      %v341 = vsub.s32 0, %v339
      %v342 = vsel %vm340, %v341, %v339
      %v343 = vclz %v342
      %v344 = vsub.s32 %v343, 2
      %vm345 = vcmp.gt.s32.totalorder 0, %v344
      %v346 = vsel %vm345, 0, %v344
      %v347 = vsub.s32 32, %v346
      %v348 = vshll.u32 %v339, %v346
      %v349 = vshrl.u32 %v331, %v347
      %v350 = vor.u32 %v348, %v349
      %v351 = vsub.s32 4294967266, %v346
      %v352 = vadd.s32 %v351, 127
      %v353 = vshll.u32 %v352, 23
      %v354 = vor.u32 4788187, %v353
      %v355 = vand.u32 2147483647, %v354
      %v357 = vcvt.s32.f32 %v350
      %v358 = vmul.f32 %v357, %v355
      %v359 = vxor.u32 %v358, 2147483648
      %v360 = vsel %vm277, %v359, %v358
      %v361 = vsub.s32 4, %v337
      %v362 = vsel %vm277, %v361, %v337
      %v363 = vsel %vm276, %v168, %v360
      %v364 = vsel %vm276, 0, %v362
      %v365 = vcosq.f32.pop %v363
      %v366 = vsinq.f32.pop %v363
      %vm367 = vweird.f32 %v168
      %v368 = vadd.s32 %v364, 3
      %v369 = vand.u32 %v368, 3
      %vm370 = vcmp.lt.s32.totalorder %v369, 2
      %vm371 = vcmp.eq.s32.totalorder %v369, 0
      %v372 = vxor.u32 %v366, 2147483648
      %v373 = vsel %vm371, %v365, %v372
      %vm374 = vcmp.eq.s32.totalorder %v369, 2
      %v375 = vxor.u32 %v365, 2147483648
      %v376 = vsel %vm374, %v375, %v366
      %v377 = vsel %vm370, %v373, %v376
      %v378 = vsel %vm367, nan, %v377
      %v379 = vmul.f32 %v274, %v274
      %v380 = vmul.f32 %v378, %v378
      %v381 = vadd.f32 %v169, %v379
      %v382 = vadd.f32 %v170, %v380
      %383 = vst [vmem:[#allocation6] sm:$0xff] %v381
      %384 = vst [vmem:[#allocation6 + $0x8] sm:$0xff] %v382
    $region25: #{_snake_alt_call.1} parent=1 // pred_fallthru
      _
    // Predicated region
    $region26: #{_snake_alt_call.1} parent=1 // pred_check
      _
    $region27: #{_snake_alt_call.1} parent=1 // pred_check_branch
      %386 = sbr.rel (0) target = $region29
    $region28: #{_snake_alt_call.1} parent=1 // pred_region
      %s388 = ssub.s32 256, 256
      %389 = vsyncadd [#allocation5], %s388
      %s390 = sshll.u32 [#allocation6], 4
      %s391 = int_to_ptr.vmem [resolvable:$true] %s390
      %396 = dma.vmem_to_hbm [thread:$0]  %s391, 256, %s3, [#allocation5], 128, 128, 8
    $region29: #{_snake_alt_call.1} parent=1 // pred_fallthru
      _
    // Predicated region
    $region30: #{_snake_alt_call.1} parent=1 // pred_check
      _
    $region31: #{_snake_alt_call.1} parent=1 // pred_check_branch
      %398 = sbr.rel (0) target = $region33
    $region32: #{_snake_alt_call.1} parent=1 // pred_region
      %399 = dma.done [#allocation5], 256
    $region33: #{_snake_alt_call.1} parent=1 // pred_fallthru
      _
    %400 = vsyncpa [#allocation4], 1
    %401 = vsyncpa [#allocation5], 1

</llo_original>
